<compile_context>
chip_gen: v7x
topology: tpu7x:2x2x1
jax: 0.10.0
libtpu: 0.0.40
codegen_flags: <defaults>
</compile_context>

<pallas_src>
import functools
import numpy as np
import jax
import jax.numpy as jnp
from jax.experimental import pallas as pl
from jax.experimental.pallas import tpu as pltpu

L_IN = 14                 # fc1 expects 112 = 16 channels * 7 positions -> input length 14
X_LANES = 16              # packed input width  (14 data cols + constant-1 lane)
H_LANES = 128             # lane-dense hidden width
OUT_LANES = 8             # packed output width (2 data cols)
X_BIAS = X_LANES - 1      # constant-1 column in the packed input
H_BIAS = H_LANES - 1      # constant-1 column carried through hidden layers
HI = jax.lax.Precision.HIGHEST   # used only by the pure-JAX reference


# ----------------------------------------------------------------------------
# Pallas kernel: 5 matmuls + ReLUs.  Biases are folded into the weight
# matrices via the constant-1 lane; intermediates are bf16, accumulation f32.
# ----------------------------------------------------------------------------
def cnn_kernel(x_ref, w1_ref, w2_ref, w3_ref, w4_ref, w5_ref, out_ref):
    f32, bf16 = jnp.float32, jnp.bfloat16
    h = x_ref[...].astype(bf16)                                                              # (TB, 16)
    h = jnp.maximum(jnp.dot(h, w1_ref[...], preferred_element_type=f32), 0.0).astype(bf16)  # conv1+ReLU
    h = jnp.maximum(jnp.dot(h, w2_ref[...], preferred_element_type=f32), 0.0).astype(bf16)  # conv2+ReLU
    h = jnp.maximum(jnp.dot(h, w3_ref[...], preferred_element_type=f32), 0.0).astype(bf16)  # pool∘conv3+ReLU
    h = jnp.maximum(jnp.dot(h, w4_ref[...], preferred_element_type=f32), 0.0).astype(bf16)  # conv4+ReLU
    out_ref[...] = jnp.dot(h, w5_ref[...], preferred_element_type=f32)                      # fc2∘fc1


# ----------------------------------------------------------------------------
# Exact dense lowering of Conv1d(k=3, s=1, p=1) and AvgPool1d(2, 2) acting on
# channel-major-flattened vectors (index = c * L + t).  NumPy, wrapper-side.
# ----------------------------------------------------------------------------
def conv1d_k3p1_as_dense(w, b, L):
    w = np.asarray(w, np.float32)
    b = np.asarray(b, np.float32)
    cout, cin, K = w.shape
    A = np.zeros((cin * L, cout * L), np.float32)
    for o in range(cout):
        for c in range(cin):
            for k in range(K):
                for t in range(L):
                    s = t + k - 1               # padding = 1
                    if 0 <= s < L:
                        A[c * L + s, o * L + t] = w[o, c, k]
    b_full = np.repeat(b, L).astype(np.float32)[None, :]      # (1, cout*L)
    return A, b_full


def avgpool2_as_dense(C, L):
    Lo = L // 2
    P = np.zeros((C * L, C * Lo), np.float32)
    for c in range(C):
        for t in range(Lo):
            P[c * L + 2 * t,     c * Lo + t] = 0.5
            P[c * L + 2 * t + 1, c * Lo + t] = 0.5
    return P


def _pack(A, b, in_rows, out_cols, *, in_bias_row, propagate_bias):
    """Zero-pad A to (in_rows, out_cols), fold bias b into row `in_bias_row`,
    optionally keep propagating the constant-1 lane into the last output col."""
    M = np.zeros((in_rows, out_cols), np.float32)
    M[:A.shape[0], :A.shape[1]] = A
    M[in_bias_row, :b.shape[1]] = b[0]
    if propagate_bias:
        M[in_bias_row, out_cols - 1] = 1.0
    return jnp.asarray(M, dtype=jnp.bfloat16)


def build_packed_weights(p):
    """Host-side NumPy packing.  Call ONCE per parameter set (hoisted)."""
    A1, b1 = conv1d_k3p1_as_dense(p['w1'], p['b1'], 14)   # (14, 28)
    A2, b2 = conv1d_k3p1_as_dense(p['w2'], p['b2'], 14)   # (28, 56)
    P      = avgpool2_as_dense(4, 14)                     # (56, 28)
    A3, b3 = conv1d_k3p1_as_dense(p['w3'], p['b3'], 7)    # (28, 56)
    A4, b4 = conv1d_k3p1_as_dense(p['w4'], p['b4'], 7)    # (56, 112)
    A3f = P @ A3                                          # fold avg-pool into conv3: (56, 56)

    W1 = np.asarray(p['fc1_w'], np.float32).T             # (112, 64)
    W2 = np.asarray(p['fc2_w'], np.float32).T             # (64, 2)
    c1 = np.asarray(p['fc1_b'], np.float32)[None, :]      # (1, 64)
    c2 = np.asarray(p['fc2_b'], np.float32)[None, :]      # (1, 2)
    Wf = W1 @ W2                                          # fold fc1∘fc2 (no activation between): (112, 2)
    cf = c1 @ W2 + c2                                     # (1, 2)

    return (
        _pack(A1,  b1, X_LANES, H_LANES,   in_bias_row=X_BIAS, propagate_bias=True),
        _pack(A2,  b2, H_LANES, H_LANES,   in_bias_row=H_BIAS, propagate_bias=True),
        _pack(A3f, b3, H_LANES, H_LANES,   in_bias_row=H_BIAS, propagate_bias=True),
        _pack(A4,  b4, H_LANES, H_LANES,   in_bias_row=H_BIAS, propagate_bias=True),
        _pack(Wf,  cf, H_LANES, OUT_LANES, in_bias_row=H_BIAS, propagate_bias=False),
    )


# ----------------------------------------------------------------------------
# Batch tiling: big tiles (amortize ~0.35us/step), <=12.5% padding waste, and
# >=2 grid steps when the batch allows it (v7x megacore sharding).
# ----------------------------------------------------------------------------
def _round_up(x, m):
    return -(-x // m) * m


def _tile_batch(B):
    b8 = _round_up(B, 8)
    tile = 8
    for cand in (8192, 4096, 2048, 1024, 512, 256, 128, 64, 32, 16, 8):
        if cand > b8:
            continue
        b_pad = _round_up(b8, cand)
        if (b_pad - b8) * 8 <= b_pad:      # <= 12.5% padding waste
            tile = cand
            break
    if b8 // tile < 2 and b8 >= 16:        # prefer >=2 parallel grid steps
        tile = _round_up(b8 // 2, 8)
    return tile, _round_up(b8, tile)


# ----------------------------------------------------------------------------
# Jitted forward: pad/pack x, run the Pallas kernel, slice the (B, 2) result.
# ----------------------------------------------------------------------------
@functools.partial(jax.jit, static_argnames=("tile_b", "b_pad"))
def _cnn_forward_padded(x, w1, w2, w3, w4, w5, *, tile_b, b_pad):
    B, C, L = x.shape
    grid = (b_pad // tile_b,)

    # Narrow packed input: cols 0..13 data, col 15 = constant 1 (bias lane).
    x_flat = jnp.zeros((b_pad, X_LANES), jnp.float32)
    x_flat = x_flat.at[:B, :C * L].set(x.reshape(B, C * L).astype(jnp.float32))
    x_flat = x_flat.at[:, X_BIAS].set(1.0)

    x_spec   = pl.BlockSpec((tile_b, X_LANES), lambda i: (i, 0))     # pipelined over batch
    w1_spec  = pl.BlockSpec((X_LANES, H_LANES), lambda i: (0, 0))    # VMEM-resident weights
    wh_spec  = pl.BlockSpec((H_LANES, H_LANES), lambda i: (0, 0))
    w5_spec  = pl.BlockSpec((H_LANES, OUT_LANES), lambda i: (0, 0))
    out_spec = pl.BlockSpec((tile_b, OUT_LANES), lambda i: (i, 0))

    mxu_cols = X_LANES * H_LANES + 3 * H_LANES * H_LANES + H_LANES * OUT_LANES
    cost = pl.CostEstimate(
        flops=2 * b_pad * mxu_cols,
        transcendentals=0,
        bytes_accessed=4 * b_pad * (X_LANES + OUT_LANES) + 2 * mxu_cols,  # f32 io + bf16 weights
    )

    out = pl.pallas_call(
        cnn_kernel,
        out_shape=jax.ShapeDtypeStruct((b_pad, OUT_LANES), jnp.float32),
        grid=grid,
        in_specs=[x_spec, w1_spec, wh_spec, wh_spec, wh_spec, w5_spec],
        out_specs=out_spec,
        compiler_params=pltpu.CompilerParams(
            dimension_semantics=("parallel",),
            vmem_limit_bytes=32 * 1024 * 1024),
        cost_estimate=cost,
    )(x_flat, w1, w2, w3, w4, w5)

    return out[:B, :2]


def cnn_forward_pallas(x, packed_weights):
    B, C, L = x.shape
    assert C == 1 and L == L_IN
    tile_b, b_pad = _tile_batch(B)
    return _cnn_forward_padded(x, *packed_weights, tile_b=tile_b, b_pad=b_pad)


# ----------------------------------------------------------------------------
# Deterministic parameter init (shapes from cnn.__init__).  Nonzero biases are
# used so the bias-lane folding path is exercised by the self-test.
# ----------------------------------------------------------------------------
def init_params(key):
    ks = jax.random.split(key, 12)

    def conv_w(k, shape):                       # kaiming normal, mode='fan_out'
        cout, _, ksz = shape
        std = float(np.sqrt(2.0 / (cout * ksz)))
        return std * jax.random.normal(k, shape, jnp.float32)

    p = {}
    p['w1'] = conv_w(ks[0], (2, 1, 3));   p['b1'] = 0.1 * jax.random.normal(ks[6],  (2,),  jnp.float32)
    p['w2'] = conv_w(ks[1], (4, 2, 3));   p['b2'] = 0.1 * jax.random.normal(ks[7],  (4,),  jnp.float32)
    p['w3'] = conv_w(ks[2], (8, 4, 3));   p['b3'] = 0.1 * jax.random.normal(ks[8],  (8,),  jnp.float32)
    p['w4'] = conv_w(ks[3], (16, 8, 3));  p['b4'] = 0.1 * jax.random.normal(ks[9],  (16,), jnp.float32)
    p['fc1_w'] = 0.1 * jax.random.normal(ks[4], (64, 112), jnp.float32)
    p['fc1_b'] = 0.1 * jax.random.normal(ks[10], (64,), jnp.float32)
    p['fc2_w'] = 0.1 * jax.random.normal(ks[5], (2, 64), jnp.float32)
    p['fc2_b'] = 0.1 * jax.random.normal(ks[11], (2,), jnp.float32)
    return p


# ----------------------------------------------------------------------------
# Pure-JAX reference (mirrors the PyTorch forward exactly) for validation.
# ----------------------------------------------------------------------------
def ref_forward(x, p):
    def conv(h, w, b):
        L = h.shape[2]
        hp = jnp.pad(h, ((0, 0), (0, 0), (1, 1)))
        cols = jnp.stack([hp[:, :, k:k + L] for k in range(3)], axis=-1)  # (B,Cin,L,3)
        return jnp.einsum('bclk,ock->bol', cols, w, precision=HI) + b[None, :, None]

    h = jax.nn.relu(conv(x, p['w1'], p['b1']))
    h = jax.nn.relu(conv(h, p['w2'], p['b2']))
    h = h.reshape(h.shape[0], h.shape[1], h.shape[2] // 2, 2).mean(-1)    # AvgPool1d(2,2)
    h = jax.nn.relu(conv(h, p['w3'], p['b3']))
    h = jax.nn.relu(conv(h, p['w4'], p['b4']))
    h = h.reshape(h.shape[0], -1)                                         # Flatten
    h = jnp.dot(h, p['fc1_w'].T, precision=HI) + p['fc1_b']
    return jnp.dot(h, p['fc2_w'].T, precision=HI) + p['fc2_b']


if __name__ == "__main__":
    key = jax.random.PRNGKey(0)
    kx, kp = jax.random.split(key)
    params = init_params(kp)

    packed = build_packed_weights(params)       # pack once, reused every call
    x = jax.random.normal(kx, (2, 1, L_IN), jnp.float32)   # (batch, channels, length)

    out = cnn_forward_pallas(x, packed)
    out = jax.block_until_ready(out)

    ref = ref_forward(x, params)
    assert out.shape == (2, 2)
    # Kernel runs bf16 weights/activations with f32 accumulation (same numerics
    # as the previously validated default-precision MXU path); reference is
    # f32/HIGHEST, so allow ~1e-2-scale deviation.
    np.testing.assert_allclose(np.asarray(out), np.asarray(ref), rtol=2e-2, atol=2e-2)

    print("KERNEL_OK")
</pallas_src>

<mosaic_0001>
module attributes {stable_mosaic.version = 11 : i64} {
  func.func @cnn_kernel(%arg0: i32, %arg1: memref<8x16xf32, #tpu.memory_space<vmem>>, %arg2: memref<16x128xbf16, #tpu.memory_space<vmem>>, %arg3: memref<128x128xbf16, #tpu.memory_space<vmem>>, %arg4: memref<128x128xbf16, #tpu.memory_space<vmem>>, %arg5: memref<128x128xbf16, #tpu.memory_space<vmem>>, %arg6: memref<128x8xbf16, #tpu.memory_space<vmem>>, %arg7: memref<8x8xf32, #tpu.memory_space<vmem>>) attributes {dimension_semantics = [#tpu.dimension_semantics<parallel>], iteration_bounds = array<i64: 1>, scalar_prefetch = 0 : i64, scratch_operands = 0 : i64, tpu.core_type = #tpu.core_type<tc>, window_params = [{transform_indices = @transform_0, window_bounds = array<i64: 8, 16>}, {pipeline_mode = #tpu.pipeline_mode<synchronous>, transform_indices = @transform_1, window_bounds = array<i64: 16, 128>}, {pipeline_mode = #tpu.pipeline_mode<synchronous>, transform_indices = @transform_2, window_bounds = array<i64: 128, 128>}, {pipeline_mode = #tpu.pipeline_mode<synchronous>, transform_indices = @transform_3, window_bounds = array<i64: 128, 128>}, {pipeline_mode = #tpu.pipeline_mode<synchronous>, transform_indices = @transform_4, window_bounds = array<i64: 128, 128>}, {pipeline_mode = #tpu.pipeline_mode<synchronous>, transform_indices = @transform_5, window_bounds = array<i64: 128, 8>}, {transform_indices = @transform_6, window_bounds = array<i64: 8, 8>}]} {
    %c0 = arith.constant 0 : index
    %c0_0 = arith.constant 0 : index
    %0 = vector.load %arg1[%c0, %c0_0] : memref<8x16xf32, #tpu.memory_space<vmem>>, vector<8x16xf32>
    %1 = arith.truncf %0 : vector<8x16xf32> to vector<8x16xbf16>
    %c0_1 = arith.constant 0 : index
    %c0_2 = arith.constant 0 : index
    %2 = vector.load %arg2[%c0_1, %c0_2] : memref<16x128xbf16, #tpu.memory_space<vmem>>, vector<16x128xbf16>
    %cst = arith.constant dense<0.000000e+00> : vector<8x128xf32>
    %3 = tpu.matmul %1, %2, %cst {dimension_numbers = #tpu.dot_dimension_numbers<[1], [0], [0], [1], [0, 0, 1, 1], [], []>} : vector<8x16xbf16>, vector<16x128xbf16>, vector<8x128xf32> -> vector<8x128xf32>
    %cst_3 = arith.constant 0.000000e+00 : f32
    %4 = vector.broadcast %cst_3 : f32 to vector<8x128xf32>
    %5 = arith.maximumf %3, %4 : vector<8x128xf32>
    %6 = arith.truncf %5 : vector<8x128xf32> to vector<8x128xbf16>
    %c0_4 = arith.constant 0 : index
    %c0_5 = arith.constant 0 : index
    %7 = vector.load %arg3[%c0_4, %c0_5] : memref<128x128xbf16, #tpu.memory_space<vmem>>, vector<128x128xbf16>
    %cst_6 = arith.constant dense<0.000000e+00> : vector<8x128xf32>
    %8 = tpu.matmul %6, %7, %cst_6 {dimension_numbers = #tpu.dot_dimension_numbers<[1], [0], [0], [1], [0, 0, 1, 1], [], []>} : vector<8x128xbf16>, vector<128x128xbf16>, vector<8x128xf32> -> vector<8x128xf32>
    %cst_7 = arith.constant 0.000000e+00 : f32
    %9 = vector.broadcast %cst_7 : f32 to vector<8x128xf32>
    %10 = arith.maximumf %8, %9 : vector<8x128xf32>
    %11 = arith.truncf %10 : vector<8x128xf32> to vector<8x128xbf16>
    %c0_8 = arith.constant 0 : index
    %c0_9 = arith.constant 0 : index
    %12 = vector.load %arg4[%c0_8, %c0_9] : memref<128x128xbf16, #tpu.memory_space<vmem>>, vector<128x128xbf16>
    %cst_10 = arith.constant dense<0.000000e+00> : vector<8x128xf32>
    %13 = tpu.matmul %11, %12, %cst_10 {dimension_numbers = #tpu.dot_dimension_numbers<[1], [0], [0], [1], [0, 0, 1, 1], [], []>} : vector<8x128xbf16>, vector<128x128xbf16>, vector<8x128xf32> -> vector<8x128xf32>
    %cst_11 = arith.constant 0.000000e+00 : f32
    %14 = vector.broadcast %cst_11 : f32 to vector<8x128xf32>
    %15 = arith.maximumf %13, %14 : vector<8x128xf32>
    %16 = arith.truncf %15 : vector<8x128xf32> to vector<8x128xbf16>
    %c0_12 = arith.constant 0 : index
    %c0_13 = arith.constant 0 : index
    %17 = vector.load %arg5[%c0_12, %c0_13] : memref<128x128xbf16, #tpu.memory_space<vmem>>, vector<128x128xbf16>
    %cst_14 = arith.constant dense<0.000000e+00> : vector<8x128xf32>
    %18 = tpu.matmul %16, %17, %cst_14 {dimension_numbers = #tpu.dot_dimension_numbers<[1], [0], [0], [1], [0, 0, 1, 1], [], []>} : vector<8x128xbf16>, vector<128x128xbf16>, vector<8x128xf32> -> vector<8x128xf32>
    %cst_15 = arith.constant 0.000000e+00 : f32
    %19 = vector.broadcast %cst_15 : f32 to vector<8x128xf32>
    %20 = arith.maximumf %18, %19 : vector<8x128xf32>
    %21 = arith.truncf %20 : vector<8x128xf32> to vector<8x128xbf16>
    %c0_16 = arith.constant 0 : index
    %c0_17 = arith.constant 0 : index
    %22 = vector.load %arg6[%c0_16, %c0_17] : memref<128x8xbf16, #tpu.memory_space<vmem>>, vector<128x8xbf16>
    %cst_18 = arith.constant dense<0.000000e+00> : vector<8x8xf32>
    %23 = tpu.matmul %21, %22, %cst_18 {dimension_numbers = #tpu.dot_dimension_numbers<[1], [0], [0], [1], [0, 0, 1, 1], [], []>} : vector<8x128xbf16>, vector<128x8xbf16>, vector<8x8xf32> -> vector<8x8xf32>
    %c0_19 = arith.constant 0 : index
    %c0_20 = arith.constant 0 : index
    %24 = vector.load %arg7[%c0_19, %c0_20] : memref<8x8xf32, #tpu.memory_space<vmem>>, vector<8x8xf32>
    tpu.vector_store %arg7[%c0_19, %c0_20], %23 {strides = array<i32>} : memref<8x8xf32, #tpu.memory_space<vmem>>, vector<8x8xf32>,
    return
  }
  func.func @transform_0(%arg0: i32) -> (i32, i32) {
    %c0_i32 = arith.constant 0 : i32
    %c0_i32_0 = arith.constant 0 : i32
    return %arg0, %c0_i32 : i32, i32
  }
  func.func @transform_1(%arg0: i32) -> (i32, i32) {
    %c0_i32 = arith.constant 0 : i32
    %c0_i32_0 = arith.constant 0 : i32
    %c0_i32_1 = arith.constant 0 : i32
    return %c0_i32, %c0_i32_0 : i32, i32
  }
  func.func @transform_2(%arg0: i32) -> (i32, i32) {
    %c0_i32 = arith.constant 0 : i32
    %c0_i32_0 = arith.constant 0 : i32
    %c0_i32_1 = arith.constant 0 : i32
    return %c0_i32, %c0_i32_0 : i32, i32
  }
  func.func @transform_3(%arg0: i32) -> (i32, i32) {
    %c0_i32 = arith.constant 0 : i32
    %c0_i32_0 = arith.constant 0 : i32
    %c0_i32_1 = arith.constant 0 : i32
    return %c0_i32, %c0_i32_0 : i32, i32
  }
  func.func @transform_4(%arg0: i32) -> (i32, i32) {
    %c0_i32 = arith.constant 0 : i32
    %c0_i32_0 = arith.constant 0 : i32
    %c0_i32_1 = arith.constant 0 : i32
    return %c0_i32, %c0_i32_0 : i32, i32
  }
  func.func @transform_5(%arg0: i32) -> (i32, i32) {
    %c0_i32 = arith.constant 0 : i32
    %c0_i32_0 = arith.constant 0 : i32
    %c0_i32_1 = arith.constant 0 : i32
    return %c0_i32, %c0_i32_0 : i32, i32
  }
  func.func @transform_6(%arg0: i32) -> (i32, i32) {
    %c0_i32 = arith.constant 0 : i32
    %c0_i32_0 = arith.constant 0 : i32
    return %arg0, %c0_i32 : i32, i32
  }
}

</mosaic_0001>

<llo_original>
// kernel: _cnn_forward_padded.1
$region0: #{_cnn_forward_padded.1}
  #allocation0 [shape = 'u32[]', space=smem, size = 0x4, offset = 0x4, fixed_abs, tag = 'smem constant byte address 0x4 - core index']
  #allocation1 [shape = 'u32[144,128]{1,0:T(1,128)}', space=vmem, size = 0x12000, scoped, tag = 'internal scratch']
  %s0 = inlined_call_operand.vmem [shape: f32[8,16], index: 0, kind: input, shape index: {}]
  %s1 = inlined_call_operand.vmem [shape: bf16[16,128], index: 1, kind: input, shape index: {}]
  %s2 = inlined_call_operand.vmem [shape: bf16[128,128], index: 2, kind: input, shape index: {}]
  %s3 = inlined_call_operand.hbm [shape: bf16[128,128], index: 3, kind: input, shape index: {}]
  %s4 = inlined_call_operand.hbm [shape: bf16[128,128], index: 4, kind: input, shape index: {}]
  %s5 = inlined_call_operand.vmem [shape: bf16[128,8], index: 5, kind: input, shape index: {}]
  %s6 = inlined_call_operand.vmem [shape: f32[8,8], index: 6, kind: output, shape index: {}]
  %s7 = sld [smem:[#allocation0]]
  $region42: #{_cnn_forward_padded.1} parent=0
    _
  %s9 = ssub.s32 1, %s7
  %s10 = scalar_select 0, %s9, %s7
  $region1: #{_cnn_forward_padded.1} parent=0
    #allocation2 [shape = 'u8[32768]{0}', space=vmem, size = 0x8000, scoped, tag = 'input window, operand 3, single buffered']
    #allocation3 [shape = 's32[1]{0}', space=sflag, size = 0x4, scoped, tag = 'scoped memory for _cnn_forward_padded.1']
    #allocation4 [shape = 'u8[32768]{0}', space=vmem, size = 0x8000, scoped, tag = 'input window, operand 4, single buffered']
    #allocation5 [shape = 's32[1]{0}', space=sflag, size = 0x4, scoped, tag = 'scoped memory for _cnn_forward_padded.1']
    %11 = vsyncpa [#allocation3], 0
    %12 = vsyncpa [#allocation5], 0
    // Predicated region
    $region2: #{_cnn_forward_padded.1} parent=1 // pred_check
      _
    $region3: #{_cnn_forward_padded.1} parent=1 // pred_check_branch
      %14 = sbr.rel (0) target = $region5
    $region4: #{_cnn_forward_padded.1} parent=1 // pred_region
      _
    $region5: #{_cnn_forward_padded.1} parent=1 // pred_fallthru
      _
    // Predicated region
    $region6: #{_cnn_forward_padded.1} parent=1 // pred_check
      _
    $region7: #{_cnn_forward_padded.1} parent=1 // pred_check_branch
      %16 = sbr.rel (0) target = $region9
    $region8: #{_cnn_forward_padded.1} parent=1 // pred_region
      _
    $region9: #{_cnn_forward_padded.1} parent=1 // pred_fallthru
      _
    // Predicated region
    $region10: #{_cnn_forward_padded.1} parent=1 // pred_check
      _
    $region11: #{_cnn_forward_padded.1} parent=1 // pred_check_branch
      %18 = sbr.rel (0) target = $region13
    $region12: #{_cnn_forward_padded.1} parent=1 // pred_region
      _
    $region13: #{_cnn_forward_padded.1} parent=1 // pred_fallthru
      _
    // Predicated region
    $region14: #{_cnn_forward_padded.1} parent=1 // pred_check
      _
    $region15: #{_cnn_forward_padded.1} parent=1 // pred_check_branch
      %20 = sbr.rel (0) target = $region17
    $region16: #{_cnn_forward_padded.1} parent=1 // pred_region
      %s22 = ssub.s32 1024, 1024
      %23 = vsyncadd [#allocation3], %s22
      %s24 = sshll.u32 [#allocation2], 4
      %s25 = int_to_ptr.vmem [resolvable:$true] %s24
      %30 = dma.hbm_to_vmem [thread:$0]  %s3, 1024, %s25, [#allocation3], 64, 64, 4
    $region17: #{_cnn_forward_padded.1} parent=1 // pred_fallthru
      _
    // Predicated region
    $region18: #{_cnn_forward_padded.1} parent=1 // pred_check
      _
    $region19: #{_cnn_forward_padded.1} parent=1 // pred_check_branch
      %32 = sbr.rel (0) target = $region21
    $region20: #{_cnn_forward_padded.1} parent=1 // pred_region
      %s34 = ssub.s32 1024, 1024
      %35 = vsyncadd [#allocation5], %s34
      %s36 = sshll.u32 [#allocation4], 4
      %s37 = int_to_ptr.vmem [resolvable:$true] %s36
      %42 = dma.hbm_to_vmem [thread:$0]  %s4, 1024, %s37, [#allocation5], 64, 64, 4
    $region21: #{_cnn_forward_padded.1} parent=1 // pred_fallthru
      _
    // Predicated region
    $region22: #{_cnn_forward_padded.1} parent=1 // pred_check
      _
    $region23: #{_cnn_forward_padded.1} parent=1 // pred_check_branch
      %44 = sbr.rel (0) target = $region25
    $region24: #{_cnn_forward_padded.1} parent=1 // pred_region
      _
    $region25: #{_cnn_forward_padded.1} parent=1 // pred_fallthru
      _
    // Predicated region
    $region26: #{_cnn_forward_padded.1} parent=1 // pred_check
      _
    $region27: #{_cnn_forward_padded.1} parent=1 // pred_check_branch
      %46 = sbr.rel (0) target = $region29
    $region28: #{_cnn_forward_padded.1} parent=1 // pred_region
      %47 = dma.done [#allocation3], 1024
    $region29: #{_cnn_forward_padded.1} parent=1 // pred_fallthru
      _
    // Predicated region
    $region30: #{_cnn_forward_padded.1} parent=1 // pred_check
      _
    $region31: #{_cnn_forward_padded.1} parent=1 // pred_check_branch
      %49 = sbr.rel (0) target = $region33
    $region32: #{_cnn_forward_padded.1} parent=1 // pred_region
      %50 = dma.done [#allocation5], 1024
    $region33: #{_cnn_forward_padded.1} parent=1 // pred_fallthru
      _
    %v52 = vld [vmem:[%s0] sm:$0xff]
    %v53 = vpack.c.bf16 %v52, %v52
    %v54 = vld [vmem:[%s1] sm:$0xf]
    %v55 = vld [vmem:[%s1 + $0x4] sm:$0xf]
    %v58 = vunpack.c.l.b16 %v54
    %v59 = vunpack.c.l.b16 %v55
    %v60 = vpack.c.b16 %v59, %v58
    %vm62 = vcmask 130048
    %v64 = vsel %vm62, %v53, 0
    %66 = vmatprep.subr.bf16.mxu0 0
    %67 = vmatpush1.bf16.msra.mxu0 %v60
    %68 = vmatprep.subr.bf16.mxu0 0
    %69 = vmatpush1.bf16.msra.mxu0 0
    %70 = vmatprep.subr.bf16.mxu0 0
    %71 = vmatpush1.bf16.msra.mxu0 0
    %72 = vmatprep.subr.bf16.mxu0 0
    %73 = vmatpush1.bf16.msra.mxu0 0
    %74 = vmatprep.subr.bf16.mxu0 0
    %75 = vmatpush1.bf16.msra.mxu0 0
    %76 = vmatprep.subr.bf16.mxu0 0
    %77 = vmatpush1.bf16.msra.mxu0 0
    %78 = vmatprep.subr.bf16.mxu0 0
    %79 = vmatpush1.bf16.msra.mxu0 0
    %80 = vmatprep.subr.bf16.mxu0 0
    %81 = vmatpush1.bf16.msra.mxu0 0
    %82 = vmatprep.subr.bf16.mxu0 0
    %83 = vmatpush1.bf16.msra.mxu0 0
    %84 = vmatprep.subr.bf16.mxu0 0
    %85 = vmatpush1.bf16.msra.mxu0 0
    %86 = vmatprep.subr.bf16.mxu0 0
    %87 = vmatpush1.bf16.msra.mxu0 0
    %88 = vmatprep.subr.bf16.mxu0 0
    %89 = vmatpush1.bf16.msra.mxu0 0
    %90 = vmatprep.subr.bf16.mxu0 0
    %91 = vmatpush1.bf16.msra.mxu0 0
    %92 = vmatprep.subr.bf16.mxu0 0
    %93 = vmatpush1.bf16.msra.mxu0 0
    %94 = vmatprep.subr.bf16.mxu0 0
    %95 = vmatpush1.bf16.msra.mxu0 0
    %96 = vmatprep.subr.bf16.mxu0 0
    %97 = vmatpush1.bf16.msra.mxu0 0
    %98 = vmatprep.mubr.bf16.mxu0 0
    %99 = vmatmul.mubr.bf16.gmra.mrb[0].mxu0 %v64
    %v100 = vpop.f32.mrb[0].mxu0
    %v101 = vadd.f32 0.0, %v100
    %v102 = vpop.f32.mrb[0].mxu0
    %v103 = vpop.f32.mrb[0].mxu0
    %v104 = vpop.f32.mrb[0].mxu0
    %105 = vdwg.mxu0
    %v106 = vmax.f32 %v101, 0.0
    %v107 = vpack.c.bf16 %v106, %v106
    %v108 = vld [vmem:[%s2] sm:$0xf]
    %v109 = vld [vmem:[%s2 + $0x4] sm:$0xf]
    %v110 = vld [vmem:[%s2 + $0x8] sm:$0xf]
    %v111 = vld [vmem:[%s2 + $0xc] sm:$0xf]
    %v112 = vld [vmem:[%s2 + $0x10] sm:$0xf]
    %v113 = vld [vmem:[%s2 + $0x14] sm:$0xf]
    %v114 = vld [vmem:[%s2 + $0x18] sm:$0xf]
    %v115 = vld [vmem:[%s2 + $0x1c] sm:$0xf]
    %v116 = vld [vmem:[%s2 + $0x20] sm:$0xf]
    %v117 = vld [vmem:[%s2 + $0x24] sm:$0xf]
    %v118 = vld [vmem:[%s2 + $0x28] sm:$0xf]
    %v119 = vld [vmem:[%s2 + $0x2c] sm:$0xf]
    %v120 = vld [vmem:[%s2 + $0x30] sm:$0xf]
    %v121 = vld [vmem:[%s2 + $0x34] sm:$0xf]
    %v122 = vld [vmem:[%s2 + $0x38] sm:$0xf]
    %v123 = vld [vmem:[%s2 + $0x3c] sm:$0xf]
    %v140 = vunpack.c.l.b16 %v108
    %v141 = vunpack.c.l.b16 %v109
    %v142 = vunpack.c.l.b16 %v110
    %v143 = vunpack.c.l.b16 %v111
    %v144 = vunpack.c.l.b16 %v112
    %v145 = vunpack.c.l.b16 %v113
    %v146 = vunpack.c.l.b16 %v114
    %v147 = vunpack.c.l.b16 %v115
    %v148 = vunpack.c.l.b16 %v116
    %v149 = vunpack.c.l.b16 %v117
    %v150 = vunpack.c.l.b16 %v118
    %v151 = vunpack.c.l.b16 %v119
    %v152 = vunpack.c.l.b16 %v120
    %v153 = vunpack.c.l.b16 %v121
    %v154 = vunpack.c.l.b16 %v122
    %v155 = vunpack.c.l.b16 %v123
    %v156 = vpack.c.b16 %v141, %v140
    %v157 = vpack.c.b16 %v143, %v142
    %v158 = vpack.c.b16 %v145, %v144
    %v159 = vpack.c.b16 %v147, %v146
    %v160 = vpack.c.b16 %v149, %v148
    %v161 = vpack.c.b16 %v151, %v150
    %v162 = vpack.c.b16 %v153, %v152
    %v163 = vpack.c.b16 %v155, %v154
    %172 = vmatprep.subr.bf16.mxu0 0
    %173 = vmatpush1.bf16.msra.mxu0 %v156
    %174 = vmatprep.subr.bf16.mxu0 0
    %175 = vmatpush1.bf16.msra.mxu0 %v157
    %176 = vmatprep.subr.bf16.mxu0 0
    %177 = vmatpush1.bf16.msra.mxu0 %v158
    %178 = vmatprep.subr.bf16.mxu0 0
    %179 = vmatpush1.bf16.msra.mxu0 %v159
    %180 = vmatprep.subr.bf16.mxu0 0
    %181 = vmatpush1.bf16.msra.mxu0 %v160
    %182 = vmatprep.subr.bf16.mxu0 0
    %183 = vmatpush1.bf16.msra.mxu0 %v161
    %184 = vmatprep.subr.bf16.mxu0 0
    %185 = vmatpush1.bf16.msra.mxu0 %v162
    %186 = vmatprep.subr.bf16.mxu0 0
    %187 = vmatpush1.bf16.msra.mxu0 %v163
    %188 = vmatprep.subr.bf16.mxu0 0
    %189 = vmatpush1.bf16.msra.mxu0 0
    %190 = vmatprep.subr.bf16.mxu0 0
    %191 = vmatpush1.bf16.msra.mxu0 0
    %192 = vmatprep.subr.bf16.mxu0 0
    %193 = vmatpush1.bf16.msra.mxu0 0
    %194 = vmatprep.subr.bf16.mxu0 0
    %195 = vmatpush1.bf16.msra.mxu0 0
    %196 = vmatprep.subr.bf16.mxu0 0
    %197 = vmatpush1.bf16.msra.mxu0 0
    %198 = vmatprep.subr.bf16.mxu0 0
    %199 = vmatpush1.bf16.msra.mxu0 0
    %200 = vmatprep.subr.bf16.mxu0 0
    %201 = vmatpush1.bf16.msra.mxu0 0
    %202 = vmatprep.subr.bf16.mxu0 0
    %203 = vmatpush1.bf16.msra.mxu0 0
    %204 = vmatprep.mubr.bf16.mxu0 0
    %205 = vmatmul.mubr.bf16.gmra.mrb[0].mxu0 %v107
    %v206 = vpop.f32.mrb[0].mxu0
    %v207 = vadd.f32 0.0, %v206
    %v208 = vpop.f32.mrb[0].mxu0
    %v209 = vpop.f32.mrb[0].mxu0
    %v210 = vpop.f32.mrb[0].mxu0
    %211 = vdwg.mxu0
    %v212 = vmax.f32 %v207, 0.0
    %v213 = vpack.c.bf16 %v212, %v212
    %v214 = vld [vmem:[#allocation2] sm:$0xf]
    %v215 = vld [vmem:[#allocation2 + $0x4] sm:$0xf]
    %v216 = vld [vmem:[#allocation2 + $0x8] sm:$0xf]
    %v217 = vld [vmem:[#allocation2 + $0xc] sm:$0xf]
    %v218 = vld [vmem:[#allocation2 + $0x10] sm:$0xf]
    %v219 = vld [vmem:[#allocation2 + $0x14] sm:$0xf]
    %v220 = vld [vmem:[#allocation2 + $0x18] sm:$0xf]
    %v221 = vld [vmem:[#allocation2 + $0x1c] sm:$0xf]
    %v222 = vld [vmem:[#allocation2 + $0x20] sm:$0xf]
    %v223 = vld [vmem:[#allocation2 + $0x24] sm:$0xf]
    %v224 = vld [vmem:[#allocation2 + $0x28] sm:$0xf]
    %v225 = vld [vmem:[#allocation2 + $0x2c] sm:$0xf]
    %v226 = vld [vmem:[#allocation2 + $0x30] sm:$0xf]
    %v227 = vld [vmem:[#allocation2 + $0x34] sm:$0xf]
    %v228 = vld [vmem:[#allocation2 + $0x38] sm:$0xf]
    %v229 = vld [vmem:[#allocation2 + $0x3c] sm:$0xf]
    %v246 = vunpack.c.l.b16 %v214
    %v247 = vunpack.c.l.b16 %v215
    %v248 = vunpack.c.l.b16 %v216
    %v249 = vunpack.c.l.b16 %v217
    %v250 = vunpack.c.l.b16 %v218
    %v251 = vunpack.c.l.b16 %v219
    %v252 = vunpack.c.l.b16 %v220
    %v253 = vunpack.c.l.b16 %v221
    %v254 = vunpack.c.l.b16 %v222
    %v255 = vunpack.c.l.b16 %v223
    %v256 = vunpack.c.l.b16 %v224
    %v257 = vunpack.c.l.b16 %v225
    %v258 = vunpack.c.l.b16 %v226
    %v259 = vunpack.c.l.b16 %v227
    %v260 = vunpack.c.l.b16 %v228
    %v261 = vunpack.c.l.b16 %v229
    %v262 = vpack.c.b16 %v247, %v246
    %v263 = vpack.c.b16 %v249, %v248
    %v264 = vpack.c.b16 %v251, %v250
    %v265 = vpack.c.b16 %v253, %v252
    %v266 = vpack.c.b16 %v255, %v254
    %v267 = vpack.c.b16 %v257, %v256
    %v268 = vpack.c.b16 %v259, %v258
    %v269 = vpack.c.b16 %v261, %v260
    %278 = vmatprep.subr.bf16.mxu0 0
    %279 = vmatpush1.bf16.msra.mxu0 %v262
    %280 = vmatprep.subr.bf16.mxu0 0
    %281 = vmatpush1.bf16.msra.mxu0 %v263
    %282 = vmatprep.subr.bf16.mxu0 0
    %283 = vmatpush1.bf16.msra.mxu0 %v264
    %284 = vmatprep.subr.bf16.mxu0 0
    %285 = vmatpush1.bf16.msra.mxu0 %v265
    %286 = vmatprep.subr.bf16.mxu0 0
    %287 = vmatpush1.bf16.msra.mxu0 %v266
    %288 = vmatprep.subr.bf16.mxu0 0
    %289 = vmatpush1.bf16.msra.mxu0 %v267
    %290 = vmatprep.subr.bf16.mxu0 0
    %291 = vmatpush1.bf16.msra.mxu0 %v268
    %292 = vmatprep.subr.bf16.mxu0 0
    %293 = vmatpush1.bf16.msra.mxu0 %v269
    %294 = vmatprep.subr.bf16.mxu0 0
    %295 = vmatpush1.bf16.msra.mxu0 0
    %296 = vmatprep.subr.bf16.mxu0 0
    %297 = vmatpush1.bf16.msra.mxu0 0
    %298 = vmatprep.subr.bf16.mxu0 0
    %299 = vmatpush1.bf16.msra.mxu0 0
    %300 = vmatprep.subr.bf16.mxu0 0
    %301 = vmatpush1.bf16.msra.mxu0 0
    %302 = vmatprep.subr.bf16.mxu0 0
    %303 = vmatpush1.bf16.msra.mxu0 0
    %304 = vmatprep.subr.bf16.mxu0 0
    %305 = vmatpush1.bf16.msra.mxu0 0
    %306 = vmatprep.subr.bf16.mxu0 0
    %307 = vmatpush1.bf16.msra.mxu0 0
    %308 = vmatprep.subr.bf16.mxu0 0
    %309 = vmatpush1.bf16.msra.mxu0 0
    %310 = vmatprep.mubr.bf16.mxu0 0
    %311 = vmatmul.mubr.bf16.gmra.mrb[0].mxu0 %v213
    %v312 = vpop.f32.mrb[0].mxu0
    %v313 = vadd.f32 0.0, %v312
    %v314 = vpop.f32.mrb[0].mxu0
    %v315 = vpop.f32.mrb[0].mxu0
    %v316 = vpop.f32.mrb[0].mxu0
    %317 = vdwg.mxu0
    %v318 = vmax.f32 %v313, 0.0
    %v319 = vpack.c.bf16 %v318, %v318
    %v320 = vld [vmem:[#allocation4] sm:$0xf]
    %v321 = vld [vmem:[#allocation4 + $0x4] sm:$0xf]
    %v322 = vld [vmem:[#allocation4 + $0x8] sm:$0xf]
    %v323 = vld [vmem:[#allocation4 + $0xc] sm:$0xf]
    %v324 = vld [vmem:[#allocation4 + $0x10] sm:$0xf]
    %v325 = vld [vmem:[#allocation4 + $0x14] sm:$0xf]
    %v326 = vld [vmem:[#allocation4 + $0x18] sm:$0xf]
    %v327 = vld [vmem:[#allocation4 + $0x1c] sm:$0xf]
    %v328 = vld [vmem:[#allocation4 + $0x20] sm:$0xf]
    %v329 = vld [vmem:[#allocation4 + $0x24] sm:$0xf]
    %v330 = vld [vmem:[#allocation4 + $0x28] sm:$0xf]
    %v331 = vld [vmem:[#allocation4 + $0x2c] sm:$0xf]
    %v332 = vld [vmem:[#allocation4 + $0x30] sm:$0xf]
    %v333 = vld [vmem:[#allocation4 + $0x34] sm:$0xf]
    %v334 = vld [vmem:[#allocation4 + $0x38] sm:$0xf]
    %v335 = vld [vmem:[#allocation4 + $0x3c] sm:$0xf]
    %v352 = vunpack.c.l.b16 %v320
    %v353 = vunpack.c.l.b16 %v321
    %v354 = vunpack.c.l.b16 %v322
    %v355 = vunpack.c.l.b16 %v323
    %v356 = vunpack.c.l.b16 %v324
    %v357 = vunpack.c.l.b16 %v325
    %v358 = vunpack.c.l.b16 %v326
    %v359 = vunpack.c.l.b16 %v327
    %v360 = vunpack.c.l.b16 %v328
    %v361 = vunpack.c.l.b16 %v329
    %v362 = vunpack.c.l.b16 %v330
    %v363 = vunpack.c.l.b16 %v331
    %v364 = vunpack.c.l.b16 %v332
    %v365 = vunpack.c.l.b16 %v333
    %v366 = vunpack.c.l.b16 %v334
    %v367 = vunpack.c.l.b16 %v335
    %v368 = vpack.c.b16 %v353, %v352
    %v369 = vpack.c.b16 %v355, %v354
    %v370 = vpack.c.b16 %v357, %v356
    %v371 = vpack.c.b16 %v359, %v358
    %v372 = vpack.c.b16 %v361, %v360
    %v373 = vpack.c.b16 %v363, %v362
    %v374 = vpack.c.b16 %v365, %v364
    %v375 = vpack.c.b16 %v367, %v366
    %384 = vmatprep.subr.bf16.mxu0 0
    %385 = vmatpush1.bf16.msra.mxu0 %v368
    %386 = vmatprep.subr.bf16.mxu0 0
    %387 = vmatpush1.bf16.msra.mxu0 %v369
    %388 = vmatprep.subr.bf16.mxu0 0
    %389 = vmatpush1.bf16.msra.mxu0 %v370
    %390 = vmatprep.subr.bf16.mxu0 0
    %391 = vmatpush1.bf16.msra.mxu0 %v371
    %392 = vmatprep.subr.bf16.mxu0 0
    %393 = vmatpush1.bf16.msra.mxu0 %v372
    %394 = vmatprep.subr.bf16.mxu0 0
    %395 = vmatpush1.bf16.msra.mxu0 %v373
    %396 = vmatprep.subr.bf16.mxu0 0
    %397 = vmatpush1.bf16.msra.mxu0 %v374
    %398 = vmatprep.subr.bf16.mxu0 0
    %399 = vmatpush1.bf16.msra.mxu0 %v375
    %400 = vmatprep.subr.bf16.mxu0 0
    %401 = vmatpush1.bf16.msra.mxu0 0
    %402 = vmatprep.subr.bf16.mxu0 0
    %403 = vmatpush1.bf16.msra.mxu0 0
    %404 = vmatprep.subr.bf16.mxu0 0
    %405 = vmatpush1.bf16.msra.mxu0 0
    %406 = vmatprep.subr.bf16.mxu0 0
    %407 = vmatpush1.bf16.msra.mxu0 0
    %408 = vmatprep.subr.bf16.mxu0 0
    %409 = vmatpush1.bf16.msra.mxu0 0
    %410 = vmatprep.subr.bf16.mxu0 0
    %411 = vmatpush1.bf16.msra.mxu0 0
    %412 = vmatprep.subr.bf16.mxu0 0
    %413 = vmatpush1.bf16.msra.mxu0 0
    %414 = vmatprep.subr.bf16.mxu0 0
    %415 = vmatpush1.bf16.msra.mxu0 0
    %416 = vmatprep.mubr.bf16.mxu0 0
    %417 = vmatmul.mubr.bf16.gmra.mrb[0].mxu0 %v319
    %v418 = vpop.f32.mrb[0].mxu0
    %v419 = vadd.f32 0.0, %v418
    %v420 = vpop.f32.mrb[0].mxu0
    %v421 = vpop.f32.mrb[0].mxu0
    %v422 = vpop.f32.mrb[0].mxu0
    %423 = vdwg.mxu0
    %v424 = vmax.f32 %v419, 0.0
    %v425 = vpack.c.bf16 %v424, %v424
    %v426 = vld [vmem:[%s5] sm:$0xf]
    %v427 = vld [vmem:[%s5 + $0x4] sm:$0xf]
    %v428 = vld [vmem:[%s5 + $0x8] sm:$0xf]
    %v429 = vld [vmem:[%s5 + $0xc] sm:$0xf]
    %v430 = vld [vmem:[%s5 + $0x10] sm:$0xf]
    %v431 = vld [vmem:[%s5 + $0x14] sm:$0xf]
    %v432 = vld [vmem:[%s5 + $0x18] sm:$0xf]
    %v433 = vld [vmem:[%s5 + $0x1c] sm:$0xf]
    %v434 = vld [vmem:[%s5 + $0x20] sm:$0xf]
    %v435 = vld [vmem:[%s5 + $0x24] sm:$0xf]
    %v436 = vld [vmem:[%s5 + $0x28] sm:$0xf]
    %v437 = vld [vmem:[%s5 + $0x2c] sm:$0xf]
    %v438 = vld [vmem:[%s5 + $0x30] sm:$0xf]
    %v439 = vld [vmem:[%s5 + $0x34] sm:$0xf]
    %v440 = vld [vmem:[%s5 + $0x38] sm:$0xf]
    %v441 = vld [vmem:[%s5 + $0x3c] sm:$0xf]
    %v458 = vunpack.c.l.b16 %v426
    %v459 = vunpack.c.l.b16 %v427
    %v460 = vunpack.c.l.b16 %v428
    %v461 = vunpack.c.l.b16 %v429
    %v462 = vunpack.c.l.b16 %v430
    %v463 = vunpack.c.l.b16 %v431
    %v464 = vunpack.c.l.b16 %v432
    %v465 = vunpack.c.l.b16 %v433
    %v466 = vunpack.c.l.b16 %v434
    %v467 = vunpack.c.l.b16 %v435
    %v468 = vunpack.c.l.b16 %v436
    %v469 = vunpack.c.l.b16 %v437
    %v470 = vunpack.c.l.b16 %v438
    %v471 = vunpack.c.l.b16 %v439
    %v472 = vunpack.c.l.b16 %v440
    %v473 = vunpack.c.l.b16 %v441
    %v474 = vpack.c.b16 %v459, %v458
    %v475 = vpack.c.b16 %v461, %v460
    %v476 = vpack.c.b16 %v463, %v462
    %v477 = vpack.c.b16 %v465, %v464
    %v478 = vpack.c.b16 %v467, %v466
    %v479 = vpack.c.b16 %v469, %v468
    %v480 = vpack.c.b16 %v471, %v470
    %v481 = vpack.c.b16 %v473, %v472
    %490 = vmatprep.subr.bf16.mxu0 0
    %491 = vmatpush1.bf16.msra.mxu0 %v474
    %492 = vmatprep.subr.bf16.mxu0 0
    %493 = vmatpush1.bf16.msra.mxu0 %v475
    %494 = vmatprep.subr.bf16.mxu0 0
    %495 = vmatpush1.bf16.msra.mxu0 %v476
    %496 = vmatprep.subr.bf16.mxu0 0
    %497 = vmatpush1.bf16.msra.mxu0 %v477
    %498 = vmatprep.subr.bf16.mxu0 0
    %499 = vmatpush1.bf16.msra.mxu0 %v478
    %500 = vmatprep.subr.bf16.mxu0 0
    %501 = vmatpush1.bf16.msra.mxu0 %v479
    %502 = vmatprep.subr.bf16.mxu0 0
    %503 = vmatpush1.bf16.msra.mxu0 %v480
    %504 = vmatprep.subr.bf16.mxu0 0
    %505 = vmatpush1.bf16.msra.mxu0 %v481
    %506 = vmatprep.subr.bf16.mxu0 0
    %507 = vmatpush1.bf16.msra.mxu0 0
    %508 = vmatprep.subr.bf16.mxu0 0
    %509 = vmatpush1.bf16.msra.mxu0 0
    %510 = vmatprep.subr.bf16.mxu0 0
    %511 = vmatpush1.bf16.msra.mxu0 0
    %512 = vmatprep.subr.bf16.mxu0 0
    %513 = vmatpush1.bf16.msra.mxu0 0
    %514 = vmatprep.subr.bf16.mxu0 0
    %515 = vmatpush1.bf16.msra.mxu0 0
    %516 = vmatprep.subr.bf16.mxu0 0
    %517 = vmatpush1.bf16.msra.mxu0 0
    %518 = vmatprep.subr.bf16.mxu0 0
    %519 = vmatpush1.bf16.msra.mxu0 0
    %520 = vmatprep.subr.bf16.mxu0 0
    %521 = vmatpush1.bf16.msra.mxu0 0
    %522 = vmatprep.mubr.bf16.mxu0 0
    %523 = vmatmul.mubr.bf16.gmra.mrb[0].mxu0 %v425
    %v524 = vpop.f32.mrb[0].mxu0
    %v525 = vadd.f32 0.0, %v524
    %v526 = vpop.f32.mrb[0].mxu0
    %v527 = vpop.f32.mrb[0].mxu0
    %v528 = vpop.f32.mrb[0].mxu0
    %529 = vdwg.mxu0
    %vm530 = vcmask 64512
    %531 = vst.msk [vmem:[%s6] sm:$0xff] %vm530, %v525
    // Predicated region
    $region34: #{_cnn_forward_padded.1} parent=1 // pred_check
      _
    $region35: #{_cnn_forward_padded.1} parent=1 // pred_check_branch
      %533 = sbr.rel (0) target = $region37
    $region36: #{_cnn_forward_padded.1} parent=1 // pred_region
      _
    $region37: #{_cnn_forward_padded.1} parent=1 // pred_fallthru
      _
    // Predicated region
    $region38: #{_cnn_forward_padded.1} parent=1 // pred_check
      _
    $region39: #{_cnn_forward_padded.1} parent=1 // pred_check_branch
      %535 = sbr.rel (0) target = $region41
    $region40: #{_cnn_forward_padded.1} parent=1 // pred_region
      _
    $region41: #{_cnn_forward_padded.1} parent=1 // pred_fallthru
      _
    %536 = vsyncpa [#allocation3], 1
    %537 = vsyncpa [#allocation5], 1

</llo_original>
